<compile_context>
chip_gen: v5e
topology: v5e:2x2
jax: 0.10.0
libtpu: 0.0.40
codegen_flags: <defaults>
</compile_context>

<pallas_src>
import functools

import jax
import jax.numpy as jnp
from jax.experimental import pallas as pl
from jax.experimental.pallas import tpu as pltpu


# ------------------------------ Pallas kernel ------------------------------ #

def _refinement_fused_kernel(x_ref, w1_ref, w2_ref, mask_ref, aff_ref, m_ref,
                             o_ref, *, eps, slope):
    """Fused conv3x3 -> BN -> LReLU -> conv3x3 -> BN -> LReLU, all VMEM-resident.

    x_ref    : (N*H, W*Cin)        f32 lane-fused NHWC input slab
    w1_ref   : (3*W*Cin,  W*Cout)  bf16 K-stacked banded conv1 weight
    w2_ref   : (3*W*Cout, W*Cout)  bf16 K-stacked banded conv2 weight
    mask_ref : (N*H, 2)            f32 [prev-row mask, next-row mask] (0 at image edges)
    aff_ref  : (4, W*Cout)         f32 lane-tiled [gamma1, beta1, gamma2, beta2]
    m_ref    : (W*Cout, W*Cout)    f32 lane -> per-channel averaging matmul (x 1/(N*H*W))
    o_ref    : (N*H, W*Cout)       f32 lane-dense output slab
    """
    x = x_ref[...]
    mask_prev = mask_ref[:, 0:1]          # (N*H, 1) -> broadcast over lanes
    mask_next = mask_ref[:, 1:2]
    aff = aff_ref[...]
    m = m_ref[...]
    nh = x.shape[0]

    def conv_bn_lrelu(inp, w_ref, gamma, beta):
        # Vertical taps via sublane rolls + image-boundary masks (no shift matmuls).
        up = pltpu.roll(inp, shift=1, axis=0) * mask_prev        # row r <- inp[r-1]
        dn = pltpu.roll(inp, shift=nh - 1, axis=0) * mask_next   # row r <- inp[r+1]
        # Single K-stacked MXU matmul per conv (horizontal taps + horizontal padding
        # live inside the banded weight; K = 3*W*Cin).
        lhs = jnp.concatenate([up, inp, dn], axis=1).astype(jnp.bfloat16)
        y = jnp.dot(lhs, w_ref[...], preferred_element_type=jnp.float32)

        # Training-mode BatchNorm2d, one-pass stats: [sum(y); sum(y*y)] through one
        # channel-averaging matmul; var = E[y^2] - mean^2.
        sums = jnp.concatenate(
            [jnp.sum(y, axis=0, keepdims=True),
             jnp.sum(y * y, axis=0, keepdims=True)], axis=0)     # (2, W*Cout)
        stats = jnp.dot(sums, m, preferred_element_type=jnp.float32)
        mean = stats[0:1, :]
        var = stats[1:2, :] - mean * mean
        scale = gamma * jax.lax.rsqrt(var + eps)                 # gamma folded in
        shift = beta - mean * scale
        yn = y * scale + shift                                   # one FMA on the slab
        return jnp.where(yn >= 0.0, yn, slope * yn)              # LeakyReLU(slope)

    h1 = conv_bn_lrelu(x, w1_ref, aff[0:1, :], aff[1:2, :])
    o_ref[...] = conv_bn_lrelu(h1, w2_ref, aff[2:3, :], aff[3:4, :])


# ------------------------------ parameter prep ------------------------------ #

def _banded_conv_weight(weight, W):
    """(Cout, Cin, 3, 3) OIHW -> (3, W*Cin, W*Cout) banded matmul weights.

    band[dy][(w_in, ci), (w_out, co)] = weight[co, ci, dy, w_in - w_out + 1]
    (zero outside the 3-tap band => horizontal padding=1 for free).
    """
    Cout, Cin, KH, KW = weight.shape
    wt = jnp.transpose(weight, (2, 3, 1, 0))                    # (KH, KW, Cin, Cout)
    dx = jnp.arange(W)[:, None] - jnp.arange(W)[None, :] + 1    # (w_in, w_out)
    valid = (dx >= 0) & (dx < KW)
    band = wt[:, jnp.clip(dx, 0, KW - 1)]                       # (KH, W, W, Cin, Cout)
    band = jnp.where(valid[None, :, :, None, None], band, 0.0)
    band = jnp.transpose(band, (0, 1, 3, 2, 4))                 # (KH, Win, Cin, Wout, Cout)
    return band.reshape(KH, W * Cin, W * Cout)


def prepare_refinement_params(params, *, N, H, W):
    """Parameter-only preprocessing, run ONCE per parameter update (hoisted out of
    the per-forward path).  Conv biases are intentionally dropped: a per-channel
    bias before training-mode BatchNorm is exactly cancelled by the mean subtraction."""
    cin1 = params["conv1_w"].shape[1]
    cout = params["conv1_w"].shape[0]

    w1 = _banded_conv_weight(params["conv1_w"].astype(jnp.float32), W)
    w1 = w1.reshape(3 * W * cin1, W * cout).astype(jnp.bfloat16)      # K-stacked
    w2 = _banded_conv_weight(params["conv2_w"].astype(jnp.float32), W)
    w2 = w2.reshape(3 * W * cout, W * cout).astype(jnp.bfloat16)

    r = jnp.arange(N * H)
    masks = jnp.stack([(r % H != 0), (r % H != H - 1)], axis=1).astype(jnp.float32)

    aff = jnp.stack([
        jnp.tile(params["bn1_gamma"], W),
        jnp.tile(params["bn1_beta"], W),
        jnp.tile(params["bn2_gamma"], W),
        jnp.tile(params["bn2_beta"], W),
    ]).astype(jnp.float32)                                            # (4, W*Cout)

    mmat = jnp.tile(jnp.eye(cout, dtype=jnp.float32), (W, W)) / float(N * H * W)
    return {"w1": w1, "w2": w2, "masks": masks, "aff": aff, "mmat": mmat}


# ------------------------------ JAX wrappers -------------------------------- #

def avg_pool2d_nchw(x, factor):
    N, C, H, W = x.shape
    return x.reshape(N, C, H // factor, factor, W // factor, factor).mean(axis=(3, 5))


def init_refinement_params(key, layout_dim, input_dim, output_dim):
    cin1 = layout_dim + input_dim
    k1, k2, k3, k4 = jax.random.split(key, 4)
    # Kaiming normal (fan_in, gain = sqrt(2) for leaky_relu a=0), like the PyTorch init.
    std1 = (2.0 / (cin1 * 9)) ** 0.5
    std2 = (2.0 / (output_dim * 9)) ** 0.5
    return {
        "conv1_w": std1 * jax.random.normal(k1, (output_dim, cin1, 3, 3), jnp.float32),
        "conv1_b": 0.01 * jax.random.normal(k2, (output_dim,), jnp.float32),
        "bn1_gamma": jnp.ones((output_dim,), jnp.float32),
        "bn1_beta": jnp.zeros((output_dim,), jnp.float32),
        "conv2_w": std2 * jax.random.normal(k3, (output_dim, output_dim, 3, 3), jnp.float32),
        "conv2_b": 0.01 * jax.random.normal(k4, (output_dim,), jnp.float32),
        "bn2_gamma": jnp.ones((output_dim,), jnp.float32),
        "bn2_beta": jnp.zeros((output_dim,), jnp.float32),
    }


@jax.jit
def refinement_forward(prepared, layout, feats):
    """layout: (N, layout_dim, HH, WW) NCHW; feats: (N, input_dim, H, W) NCHW."""
    N, _, HH, WW = layout.shape
    _, _, H, W = feats.shape
    assert HH >= H
    if HH > H:
        factor = HH // H
        assert HH % factor == 0
        assert WW % factor == 0 and WW // factor == W
        layout = avg_pool2d_nchw(layout, factor)

    cout = prepared["mmat"].shape[0] // W
    # TODO(synk): in a full CRN pipeline keep activations NHWC/lane-fused end-to-end
    # to avoid these NCHW<->NHWC relayouts and the channel-concat materialization.
    net_input = jnp.concatenate([layout, feats], axis=1)               # NCHW concat
    x = jnp.transpose(net_input, (0, 2, 3, 1)).astype(jnp.float32)     # NHWC
    cin1 = x.shape[-1]
    x2d = x.reshape(N * H, W * cin1)                                   # lane-fused slab

    vmem = pl.BlockSpec(memory_space=pltpu.MemorySpace.VMEM)
    out2d = pl.pallas_call(
        functools.partial(_refinement_fused_kernel, eps=1e-5, slope=0.01),
        out_shape=jax.ShapeDtypeStruct((N * H, W * cout), jnp.float32),
        in_specs=[vmem] * 6,
        out_specs=vmem,
        compiler_params=pltpu.CompilerParams(vmem_limit_bytes=32 * 1024 * 1024),
    )(x2d, prepared["w1"], prepared["w2"], prepared["masks"],
      prepared["aff"], prepared["mmat"])

    out = out2d.reshape(N, H, W, cout)
    return jnp.transpose(out, (0, 3, 1, 2))                            # back to NCHW


# --------------------- pure-XLA reference (sanity check) -------------------- #

def reference_forward(params, layout, feats):
    _, _, HH, WW = layout.shape
    _, _, H, W = feats.shape
    if HH > H:
        layout = avg_pool2d_nchw(layout, HH // H)
    x = jnp.concatenate([layout, feats], axis=1).astype(jnp.float32)

    def block(x, w, b, g, be):
        y = jax.lax.conv_general_dilated(
            x, w, window_strides=(1, 1), padding=((1, 1), (1, 1)),
            dimension_numbers=("NCHW", "OIHW", "NCHW"))
        y = y + b[None, :, None, None]        # bias kept here; cancelled by BN below
        mean = jnp.mean(y, axis=(0, 2, 3), keepdims=True)
        var = jnp.mean((y - mean) ** 2, axis=(0, 2, 3), keepdims=True)
        y = (y - mean) * jax.lax.rsqrt(var + 1e-5)
        y = y * g[None, :, None, None] + be[None, :, None, None]
        return jnp.where(y >= 0.0, y, 0.01 * y)

    y = block(x, params["conv1_w"], params["conv1_b"],
              params["bn1_gamma"], params["bn1_beta"])
    y = block(y, params["conv2_w"], params["conv2_b"],
              params["bn2_gamma"], params["bn2_beta"])
    return y


# --------------------------------- main ------------------------------------- #

if __name__ == "__main__":
    key = jax.random.PRNGKey(0)
    k_layout, k_feats, k_params = jax.random.split(key, 3)

    N = 2
    layout_dim, input_dim, output_dim = 4, 4, 8
    HH = WW = 32          # layout spatial (gets avg-pooled by factor 2)
    H = W = 16            # feats spatial

    layout = jax.random.normal(k_layout, (N, layout_dim, HH, WW), jnp.float32)
    feats = jax.random.normal(k_feats, (N, input_dim, H, W), jnp.float32)
    params = init_refinement_params(k_params, layout_dim, input_dim, output_dim)

    # Hoisted, once-per-parameter-update preprocessing.
    prepared = jax.tree.map(jax.block_until_ready,
                            prepare_refinement_params(params, N=N, H=H, W=W))

    out = refinement_forward(prepared, layout, feats)
    out = jax.block_until_ready(out)
    assert out.shape == (N, output_dim, H, W), out.shape

    # Tolerance accounts for bf16 MXU operands in the kernel vs f32 XLA reference;
    # structural/indexing bugs would give O(1) errors.
    ref = jax.block_until_ready(reference_forward(params, layout, feats))
    err = float(jnp.max(jnp.abs(out - ref)))
    assert err < 2e-1, f"max abs err vs XLA reference: {err}"

    print("KERNEL_OK")
</pallas_src>

<mosaic_0001>
module attributes {stable_mosaic.version = 11 : i64} {
  func.func @_refinement_fused_kernel(%arg0: memref<32x128xf32, #tpu.memory_space<vmem>>, %arg1: memref<384x128xbf16, #tpu.memory_space<vmem>>, %arg2: memref<384x128xbf16, #tpu.memory_space<vmem>>, %arg3: memref<32x2xf32, #tpu.memory_space<vmem>>, %arg4: memref<4x128xf32, #tpu.memory_space<vmem>>, %arg5: memref<128x128xf32, #tpu.memory_space<vmem>>, %arg6: memref<32x128xf32, #tpu.memory_space<vmem>>) attributes {dimension_semantics = [], scalar_prefetch = 0 : i64, scratch_operands = 0 : i64, tpu.core_type = #tpu.core_type<tc>} {
    %c0 = arith.constant 0 : index
    %c0_0 = arith.constant 0 : index
    %0 = vector.load %arg0[%c0, %c0_0] : memref<32x128xf32, #tpu.memory_space<vmem>>, vector<32x128xf32>
    %c0_1 = arith.constant 0 : index
    %c0_2 = arith.constant 0 : index
    %1 = vector.load %arg3[%c0_1, %c0_2] : memref<32x2xf32, #tpu.memory_space<vmem>>, vector<32x1xf32>
    %c0_3 = arith.constant 0 : index
    %c1 = arith.constant 1 : index
    %2 = vector.load %arg3[%c0_3, %c1] : memref<32x2xf32, #tpu.memory_space<vmem>>, vector<32x1xf32>
    %c0_4 = arith.constant 0 : index
    %c0_5 = arith.constant 0 : index
    %3 = vector.load %arg4[%c0_4, %c0_5] : memref<4x128xf32, #tpu.memory_space<vmem>>, vector<4x128xf32>
    %c0_6 = arith.constant 0 : index
    %c0_7 = arith.constant 0 : index
    %4 = vector.load %arg5[%c0_6, %c0_7] : memref<128x128xf32, #tpu.memory_space<vmem>>, vector<128x128xf32>
    %5 = vector.extract_strided_slice %3 {offsets = [0, 0], sizes = [1, 128], strides = [1, 1]} : vector<4x128xf32> to vector<1x128xf32>
    %6 = vector.extract_strided_slice %3 {offsets = [1, 0], sizes = [1, 128], strides = [1, 1]} : vector<4x128xf32> to vector<1x128xf32>
    %c1_i32 = arith.constant 1 : i32
    %7 = tpu.dynamic_rotate %0 by %c1_i32 dim 0 : vector<32x128xf32>, i32 -> vector<32x128xf32>
    %8 = vector.broadcast %1 : vector<32x1xf32> to vector<32x128xf32>
    %9 = arith.mulf %7, %8 : vector<32x128xf32>
    %c31_i32 = arith.constant 31 : i32
    %10 = tpu.dynamic_rotate %0 by %c31_i32 dim 0 : vector<32x128xf32>, i32 -> vector<32x128xf32>
    %11 = vector.broadcast %2 : vector<32x1xf32> to vector<32x128xf32>
    %12 = arith.mulf %10, %11 : vector<32x128xf32>
    %13 = tpu.concatenate %9, %0, %12 in 1 : vector<32x128xf32>, vector<32x128xf32>, vector<32x128xf32> -> vector<32x384xf32>
    %14 = arith.truncf %13 : vector<32x384xf32> to vector<32x384xbf16>
    %c0_8 = arith.constant 0 : index
    %c0_9 = arith.constant 0 : index
    %15 = vector.load %arg1[%c0_8, %c0_9] : memref<384x128xbf16, #tpu.memory_space<vmem>>, vector<384x128xbf16>
    %cst = arith.constant dense<0.000000e+00> : vector<32x128xf32>
    %16 = tpu.matmul %14, %15, %cst {dimension_numbers = #tpu.dot_dimension_numbers<[1], [0], [0], [1], [0, 0, 1, 1], [], []>} : vector<32x384xbf16>, vector<384x128xbf16>, vector<32x128xf32> -> vector<32x128xf32>
    %cst_10 = arith.constant dense<0.000000e+00> : vector<128xf32>
    %17 = vector.multi_reduction <add>, %16, %cst_10 [0] : vector<32x128xf32> to vector<128xf32>
    %18 = vector.shape_cast %17 : vector<128xf32> to vector<1x128xf32>
    %19 = arith.mulf %16, %16 : vector<32x128xf32>
    %cst_11 = arith.constant dense<0.000000e+00> : vector<128xf32>
    %20 = vector.multi_reduction <add>, %19, %cst_11 [0] : vector<32x128xf32> to vector<128xf32>
    %21 = vector.shape_cast %20 : vector<128xf32> to vector<1x128xf32>
    %22 = tpu.concatenate %18, %21 in 0 : vector<1x128xf32>, vector<1x128xf32> -> vector<2x128xf32>
    %cst_12 = arith.constant dense<0.000000e+00> : vector<2x128xf32>
    %23 = tpu.matmul %22, %4, %cst_12 {dimension_numbers = #tpu.dot_dimension_numbers<[1], [0], [0], [1], [0, 0, 1, 1], [], []>} : vector<2x128xf32>, vector<128x128xf32>, vector<2x128xf32> -> vector<2x128xf32>
    %24 = vector.extract_strided_slice %23 {offsets = [0, 0], sizes = [1, 128], strides = [1, 1]} : vector<2x128xf32> to vector<1x128xf32>
    %25 = vector.extract_strided_slice %23 {offsets = [1, 0], sizes = [1, 128], strides = [1, 1]} : vector<2x128xf32> to vector<1x128xf32>
    %26 = arith.mulf %24, %24 : vector<1x128xf32>
    %27 = arith.subf %25, %26 : vector<1x128xf32>
    %cst_13 = arith.constant 9.99999974E-6 : f32
    %28 = vector.broadcast %cst_13 : f32 to vector<1x128xf32>
    %29 = arith.addf %27, %28 : vector<1x128xf32>
    %30 = math.rsqrt %29 : vector<1x128xf32>
    %31 = arith.mulf %5, %30 : vector<1x128xf32>
    %32 = arith.mulf %24, %31 : vector<1x128xf32>
    %33 = arith.subf %6, %32 : vector<1x128xf32>
    %34 = vector.broadcast %31 : vector<1x128xf32> to vector<32x128xf32>
    %35 = arith.mulf %16, %34 : vector<32x128xf32>
    %36 = vector.broadcast %33 : vector<1x128xf32> to vector<32x128xf32>
    %37 = arith.addf %35, %36 : vector<32x128xf32>
    %cst_14 = arith.constant 0.000000e+00 : f32
    %38 = vector.broadcast %cst_14 : f32 to vector<32x128xf32>
    %39 = arith.cmpf oge, %37, %38 : vector<32x128xf32>
    %cst_15 = arith.constant 0.00999999977 : f32
    %40 = vector.broadcast %cst_15 : f32 to vector<32x128xf32>
    %41 = arith.mulf %40, %37 : vector<32x128xf32>
    %42 = arith.select %39, %37, %41 : vector<32x128xi1>, vector<32x128xf32>
    %43 = vector.extract_strided_slice %3 {offsets = [2, 0], sizes = [1, 128], strides = [1, 1]} : vector<4x128xf32> to vector<1x128xf32>
    %44 = vector.extract_strided_slice %3 {offsets = [3, 0], sizes = [1, 128], strides = [1, 1]} : vector<4x128xf32> to vector<1x128xf32>
    %c1_i32_16 = arith.constant 1 : i32
    %45 = tpu.dynamic_rotate %42 by %c1_i32_16 dim 0 : vector<32x128xf32>, i32 -> vector<32x128xf32>
    %46 = vector.broadcast %1 : vector<32x1xf32> to vector<32x128xf32>
    %47 = arith.mulf %45, %46 : vector<32x128xf32>
    %c31_i32_17 = arith.constant 31 : i32
    %48 = tpu.dynamic_rotate %42 by %c31_i32_17 dim 0 : vector<32x128xf32>, i32 -> vector<32x128xf32>
    %49 = vector.broadcast %2 : vector<32x1xf32> to vector<32x128xf32>
    %50 = arith.mulf %48, %49 : vector<32x128xf32>
    %51 = tpu.concatenate %47, %42, %50 in 1 : vector<32x128xf32>, vector<32x128xf32>, vector<32x128xf32> -> vector<32x384xf32>
    %52 = arith.truncf %51 : vector<32x384xf32> to vector<32x384xbf16>
    %c0_18 = arith.constant 0 : index
    %c0_19 = arith.constant 0 : index
    %53 = vector.load %arg2[%c0_18, %c0_19] : memref<384x128xbf16, #tpu.memory_space<vmem>>, vector<384x128xbf16>
    %cst_20 = arith.constant dense<0.000000e+00> : vector<32x128xf32>
    %54 = tpu.matmul %52, %53, %cst_20 {dimension_numbers = #tpu.dot_dimension_numbers<[1], [0], [0], [1], [0, 0, 1, 1], [], []>} : vector<32x384xbf16>, vector<384x128xbf16>, vector<32x128xf32> -> vector<32x128xf32>
    %cst_21 = arith.constant dense<0.000000e+00> : vector<128xf32>
    %55 = vector.multi_reduction <add>, %54, %cst_21 [0] : vector<32x128xf32> to vector<128xf32>
    %56 = vector.shape_cast %55 : vector<128xf32> to vector<1x128xf32>
    %57 = arith.mulf %54, %54 : vector<32x128xf32>
    %cst_22 = arith.constant dense<0.000000e+00> : vector<128xf32>
    %58 = vector.multi_reduction <add>, %57, %cst_22 [0] : vector<32x128xf32> to vector<128xf32>
    %59 = vector.shape_cast %58 : vector<128xf32> to vector<1x128xf32>
    %60 = tpu.concatenate %56, %59 in 0 : vector<1x128xf32>, vector<1x128xf32> -> vector<2x128xf32>
    %cst_23 = arith.constant dense<0.000000e+00> : vector<2x128xf32>
    %61 = tpu.matmul %60, %4, %cst_23 {dimension_numbers = #tpu.dot_dimension_numbers<[1], [0], [0], [1], [0, 0, 1, 1], [], []>} : vector<2x128xf32>, vector<128x128xf32>, vector<2x128xf32> -> vector<2x128xf32>
    %62 = vector.extract_strided_slice %61 {offsets = [0, 0], sizes = [1, 128], strides = [1, 1]} : vector<2x128xf32> to vector<1x128xf32>
    %63 = vector.extract_strided_slice %61 {offsets = [1, 0], sizes = [1, 128], strides = [1, 1]} : vector<2x128xf32> to vector<1x128xf32>
    %64 = arith.mulf %62, %62 : vector<1x128xf32>
    %65 = arith.subf %63, %64 : vector<1x128xf32>
    %cst_24 = arith.constant 9.99999974E-6 : f32
    %66 = vector.broadcast %cst_24 : f32 to vector<1x128xf32>
    %67 = arith.addf %65, %66 : vector<1x128xf32>
    %68 = math.rsqrt %67 : vector<1x128xf32>
    %69 = arith.mulf %43, %68 : vector<1x128xf32>
    %70 = arith.mulf %62, %69 : vector<1x128xf32>
    %71 = arith.subf %44, %70 : vector<1x128xf32>
    %72 = vector.broadcast %69 : vector<1x128xf32> to vector<32x128xf32>
    %73 = arith.mulf %54, %72 : vector<32x128xf32>
    %74 = vector.broadcast %71 : vector<1x128xf32> to vector<32x128xf32>
    %75 = arith.addf %73, %74 : vector<32x128xf32>
    %cst_25 = arith.constant 0.000000e+00 : f32
    %76 = vector.broadcast %cst_25 : f32 to vector<32x128xf32>
    %77 = arith.cmpf oge, %75, %76 : vector<32x128xf32>
    %cst_26 = arith.constant 0.00999999977 : f32
    %78 = vector.broadcast %cst_26 : f32 to vector<32x128xf32>
    %79 = arith.mulf %78, %75 : vector<32x128xf32>
    %80 = arith.select %77, %75, %79 : vector<32x128xi1>, vector<32x128xf32>
    %c0_27 = arith.constant 0 : index
    %c0_28 = arith.constant 0 : index
    %81 = vector.load %arg6[%c0_27, %c0_28] : memref<32x128xf32, #tpu.memory_space<vmem>>, vector<32x128xf32>
    tpu.vector_store %arg6[%c0_27, %c0_28], %80 {strides = array<i32>} : memref<32x128xf32, #tpu.memory_space<vmem>>, vector<32x128xf32>,
    return
  }
}

</mosaic_0001>

<llo_original>
// kernel: refinement_forward.1
$region0: #{refinement_forward.1}
  #allocation0 [shape = 'u32[]', space=smem, size = 0x4, offset = 0x4, fixed_abs, tag = 'smem constant byte address 0x4 - core index']
  #allocation1 [shape = 'u32[72,128]{1,0:T(1,128)}', space=vmem, size = 0x9000, scoped, tag = 'internal scratch']
  %s0 = inlined_call_operand.vmem [shape: f32[32,128], index: 0, kind: input, shape index: {}]
  %s1 = inlined_call_operand.vmem [shape: bf16[384,128], index: 1, kind: input, shape index: {}]
  %s2 = inlined_call_operand.vmem [shape: bf16[384,128], index: 2, kind: input, shape index: {}]
  %s3 = inlined_call_operand.vmem [shape: f32[32,2], index: 3, kind: input, shape index: {}]
  %s4 = inlined_call_operand.vmem [shape: f32[4,128], index: 4, kind: input, shape index: {}]
  %s5 = inlined_call_operand.vmem [shape: f32[128,128], index: 5, kind: input, shape index: {}]
  %s6 = inlined_call_operand.vmem [shape: f32[32,128], index: 6, kind: output, shape index: {}]
  %s7 = sld [smem:[#allocation0]]
  $region34: #{refinement_forward.1} parent=0
    _
  %s9 = ssub.s32 1, %s7
  %s10 = scalar_select 0, %s9, %s7
  // Predicated region
  $region2: #{refinement_forward.1} parent=0 // pred_check
    _
  $region3: #{refinement_forward.1} parent=0 // pred_check_branch
    %12 = sbr.rel (0) target = $region5
  $region4: #{refinement_forward.1} parent=0 // pred_region
    _
  $region5: #{refinement_forward.1} parent=0 // pred_fallthru
    _
  // Predicated region
  $region6: #{refinement_forward.1} parent=0 // pred_check
    _
  $region7: #{refinement_forward.1} parent=0 // pred_check_branch
    %14 = sbr.rel (0) target = $region9
  $region8: #{refinement_forward.1} parent=0 // pred_region
    _
  $region9: #{refinement_forward.1} parent=0 // pred_fallthru
    _
  // Predicated region
  $region10: #{refinement_forward.1} parent=0 // pred_check
    _
  $region11: #{refinement_forward.1} parent=0 // pred_check_branch
    %16 = sbr.rel (0) target = $region13
  $region12: #{refinement_forward.1} parent=0 // pred_region
    _
  $region13: #{refinement_forward.1} parent=0 // pred_fallthru
    _
  // Predicated region
  $region14: #{refinement_forward.1} parent=0 // pred_check
    _
  $region15: #{refinement_forward.1} parent=0 // pred_check_branch
    %18 = sbr.rel (0) target = $region17
  $region16: #{refinement_forward.1} parent=0 // pred_region
    _
  $region17: #{refinement_forward.1} parent=0 // pred_fallthru
    _
  // Predicated region
  $region18: #{refinement_forward.1} parent=0 // pred_check
    _
  $region19: #{refinement_forward.1} parent=0 // pred_check_branch
    %20 = sbr.rel (0) target = $region21
  $region20: #{refinement_forward.1} parent=0 // pred_region
    _
  $region21: #{refinement_forward.1} parent=0 // pred_fallthru
    _
  // Predicated region
  $region22: #{refinement_forward.1} parent=0 // pred_check
    _
  $region23: #{refinement_forward.1} parent=0 // pred_check_branch
    %22 = sbr.rel (0) target = $region25
  $region24: #{refinement_forward.1} parent=0 // pred_region
    _
  $region25: #{refinement_forward.1} parent=0 // pred_fallthru
    _
  %v23 = vld [vmem:[%s0] sm:$0xff]
  %v24 = vld [vmem:[%s0 + $0x8] sm:$0xff]
  %v25 = vld [vmem:[%s0 + $0x10] sm:$0xff]
  %v26 = vld [vmem:[%s0 + $0x18] sm:$0xff]
  %v27 = vld [vmem:[%s3] sm:$0xff]
  %v28 = vld [vmem:[%s3 + $0x8] sm:$0xff]
  %v29 = vld [vmem:[%s3 + $0x10] sm:$0xff]
  %v30 = vld [vmem:[%s3 + $0x18] sm:$0xff]
  %v31 = vld [vmem:[%s4] sm:$0xf]
  %v32 = vld [vmem:[%s5] sm:$0xff]
  %v33 = vld [vmem:[%s5 + $0x8] sm:$0xff]
  %v34 = vld [vmem:[%s5 + $0x10] sm:$0xff]
  %v35 = vld [vmem:[%s5 + $0x18] sm:$0xff]
  %v36 = vld [vmem:[%s5 + $0x20] sm:$0xff]
  %v37 = vld [vmem:[%s5 + $0x28] sm:$0xff]
  %v38 = vld [vmem:[%s5 + $0x30] sm:$0xff]
  %v39 = vld [vmem:[%s5 + $0x38] sm:$0xff]
  %v40 = vld [vmem:[%s5 + $0x40] sm:$0xff]
  %v41 = vld [vmem:[%s5 + $0x48] sm:$0xff]
  %v42 = vld [vmem:[%s5 + $0x50] sm:$0xff]
  %v43 = vld [vmem:[%s5 + $0x58] sm:$0xff]
  %v44 = vld [vmem:[%s5 + $0x60] sm:$0xff]
  %v45 = vld [vmem:[%s5 + $0x68] sm:$0xff]
  %v46 = vld [vmem:[%s5 + $0x70] sm:$0xff]
  %v47 = vld [vmem:[%s5 + $0x78] sm:$0xff]
  %v48 = vrot.slane %v23, 7
  %v49 = vrot.slane %v24, 7
  %v50 = vrot.slane %v25, 7
  %v51 = vrot.slane %v26, 7
  %v52 = vlaneseq
  %v53 = vshrl.u32 %v52, 7
  %vm54 = vcmp.lt.s32.totalorder %v53, 1
  %v55 = vsel %vm54, %v50, %v51
  %v56 = vsel %vm54, %v49, %v50
  %v57 = vsel %vm54, %v48, %v49
  %v58 = vsel %vm54, %v51, %v48
  %60 = vset.pattern.permute.xlu0 0
  %61 = vperm.xlu0 %60, %v27
  %v62 = vpop.permute.xlu0 %61
  %65 = vset.pattern.permute.xlu0 0
  %66 = vperm.xlu0 %65, %v28
  %v67 = vpop.permute.xlu0 %66
  %70 = vset.pattern.permute.xlu0 0
  %71 = vperm.xlu0 %70, %v29
  %v72 = vpop.permute.xlu0 %71
  %75 = vset.pattern.permute.xlu0 0
  %76 = vperm.xlu0 %75, %v30
  %v77 = vpop.permute.xlu0 %76
  %v79 = vmul.f32 %v58, %v62
  %v80 = vmul.f32 %v57, %v67
  %v81 = vmul.f32 %v56, %v72
  %v82 = vmul.f32 %v55, %v77
  %v83 = vrot.slane %v23, 1
  %v84 = vrot.slane %v24, 1
  %v85 = vrot.slane %v25, 1
  %v86 = vrot.slane %v26, 1
  %vm87 = vcmp.lt.s32.totalorder %v53, 7
  %v88 = vsel %vm87, %v85, %v86
  %v89 = vsel %vm87, %v84, %v85
  %v90 = vsel %vm87, %v83, %v84
  %v91 = vsel %vm87, %v86, %v83
  %92 = vset.pattern.permute.xlu0 1
  %93 = vperm.xlu0 %92, %v27
  %v94 = vpop.permute.xlu0 %93
  %96 = vset.pattern.permute.xlu0 1
  %97 = vperm.xlu0 %96, %v28
  %v98 = vpop.permute.xlu0 %97
  %100 = vset.pattern.permute.xlu0 1
  %101 = vperm.xlu0 %100, %v29
  %v102 = vpop.permute.xlu0 %101
  %104 = vset.pattern.permute.xlu0 1
  %105 = vperm.xlu0 %104, %v30
  %v106 = vpop.permute.xlu0 %105
  %v108 = vmul.f32 %v90, %v94
  %v109 = vmul.f32 %v89, %v98
  %v110 = vmul.f32 %v88, %v102
  %v111 = vmul.f32 %v91, %v106
  %v112 = vpack.c.bf16 %v80, %v79
  %v113 = vpack.c.bf16 %v24, %v23
  %v114 = vpack.c.bf16 %v109, %v108
  %v115 = vpack.c.bf16 %v82, %v81
  %v116 = vpack.c.bf16 %v26, %v25
  %v117 = vpack.c.bf16 %v111, %v110
  %v118 = vld [vmem:[%s1] sm:$0xf]
  %v119 = vld [vmem:[%s1 + $0x4] sm:$0xf]
  %v120 = vld [vmem:[%s1 + $0x8] sm:$0xf]
  %v121 = vld [vmem:[%s1 + $0xc] sm:$0xf]
  %v122 = vld [vmem:[%s1 + $0x10] sm:$0xf]
  %v123 = vld [vmem:[%s1 + $0x14] sm:$0xf]
  %v124 = vld [vmem:[%s1 + $0x18] sm:$0xf]
  %v125 = vld [vmem:[%s1 + $0x1c] sm:$0xf]
  %v126 = vld [vmem:[%s1 + $0x20] sm:$0xf]
  %v127 = vld [vmem:[%s1 + $0x24] sm:$0xf]
  %v128 = vld [vmem:[%s1 + $0x28] sm:$0xf]
  %v129 = vld [vmem:[%s1 + $0x2c] sm:$0xf]
  %v130 = vld [vmem:[%s1 + $0x30] sm:$0xf]
  %v131 = vld [vmem:[%s1 + $0x34] sm:$0xf]
  %v132 = vld [vmem:[%s1 + $0x38] sm:$0xf]
  %v133 = vld [vmem:[%s1 + $0x3c] sm:$0xf]
  %v134 = vld [vmem:[%s1 + $0x40] sm:$0xf]
  %v135 = vld [vmem:[%s1 + $0x44] sm:$0xf]
  %v136 = vld [vmem:[%s1 + $0x48] sm:$0xf]
  %v137 = vld [vmem:[%s1 + $0x4c] sm:$0xf]
  %v138 = vld [vmem:[%s1 + $0x50] sm:$0xf]
  %v139 = vld [vmem:[%s1 + $0x54] sm:$0xf]
  %v140 = vld [vmem:[%s1 + $0x58] sm:$0xf]
  %v141 = vld [vmem:[%s1 + $0x5c] sm:$0xf]
  %v142 = vld [vmem:[%s1 + $0x60] sm:$0xf]
  %v143 = vld [vmem:[%s1 + $0x64] sm:$0xf]
  %v144 = vld [vmem:[%s1 + $0x68] sm:$0xf]
  %v145 = vld [vmem:[%s1 + $0x6c] sm:$0xf]
  %v146 = vld [vmem:[%s1 + $0x70] sm:$0xf]
  %v147 = vld [vmem:[%s1 + $0x74] sm:$0xf]
  %v148 = vld [vmem:[%s1 + $0x78] sm:$0xf]
  %v149 = vld [vmem:[%s1 + $0x7c] sm:$0xf]
  %v150 = vld [vmem:[%s1 + $0x80] sm:$0xf]
  %v151 = vld [vmem:[%s1 + $0x84] sm:$0xf]
  %v152 = vld [vmem:[%s1 + $0x88] sm:$0xf]
  %v153 = vld [vmem:[%s1 + $0x8c] sm:$0xf]
  %v154 = vld [vmem:[%s1 + $0x90] sm:$0xf]
  %v155 = vld [vmem:[%s1 + $0x94] sm:$0xf]
  %v156 = vld [vmem:[%s1 + $0x98] sm:$0xf]
  %v157 = vld [vmem:[%s1 + $0x9c] sm:$0xf]
  %v158 = vld [vmem:[%s1 + $0xa0] sm:$0xf]
  %v159 = vld [vmem:[%s1 + $0xa4] sm:$0xf]
  %v160 = vld [vmem:[%s1 + $0xa8] sm:$0xf]
  %v161 = vld [vmem:[%s1 + $0xac] sm:$0xf]
  %v162 = vld [vmem:[%s1 + $0xb0] sm:$0xf]
  %v163 = vld [vmem:[%s1 + $0xb4] sm:$0xf]
  %v164 = vld [vmem:[%s1 + $0xb8] sm:$0xf]
  %v165 = vld [vmem:[%s1 + $0xbc] sm:$0xf]
  %v214 = vunpack.c.l.b16 %v118
  %v215 = vunpack.c.l.b16 %v119
  %v216 = vunpack.c.l.b16 %v120
  %v217 = vunpack.c.l.b16 %v121
  %v218 = vunpack.c.l.b16 %v122
  %v219 = vunpack.c.l.b16 %v123
  %v220 = vunpack.c.l.b16 %v124
  %v221 = vunpack.c.l.b16 %v125
  %v222 = vunpack.c.l.b16 %v126
  %v223 = vunpack.c.l.b16 %v127
  %v224 = vunpack.c.l.b16 %v128
  %v225 = vunpack.c.l.b16 %v129
  %v226 = vunpack.c.l.b16 %v130
  %v227 = vunpack.c.l.b16 %v131
  %v228 = vunpack.c.l.b16 %v132
  %v229 = vunpack.c.l.b16 %v133
  %v230 = vunpack.c.l.b16 %v134
  %v231 = vunpack.c.l.b16 %v135
  %v232 = vunpack.c.l.b16 %v136
  %v233 = vunpack.c.l.b16 %v137
  %v234 = vunpack.c.l.b16 %v138
  %v235 = vunpack.c.l.b16 %v139
  %v236 = vunpack.c.l.b16 %v140
  %v237 = vunpack.c.l.b16 %v141
  %v238 = vunpack.c.l.b16 %v142
  %v239 = vunpack.c.l.b16 %v143
  %v240 = vunpack.c.l.b16 %v144
  %v241 = vunpack.c.l.b16 %v145
  %v242 = vunpack.c.l.b16 %v146
  %v243 = vunpack.c.l.b16 %v147
  %v244 = vunpack.c.l.b16 %v148
  %v245 = vunpack.c.l.b16 %v149
  %v246 = vunpack.c.l.b16 %v150
  %v247 = vunpack.c.l.b16 %v151
  %v248 = vunpack.c.l.b16 %v152
  %v249 = vunpack.c.l.b16 %v153
  %v250 = vunpack.c.l.b16 %v154
  %v251 = vunpack.c.l.b16 %v155
  %v252 = vunpack.c.l.b16 %v156
  %v253 = vunpack.c.l.b16 %v157
  %v254 = vunpack.c.l.b16 %v158
  %v255 = vunpack.c.l.b16 %v159
  %v256 = vunpack.c.l.b16 %v160
  %v257 = vunpack.c.l.b16 %v161
  %v258 = vunpack.c.l.b16 %v162
  %v259 = vunpack.c.l.b16 %v163
  %v260 = vunpack.c.l.b16 %v164
  %v261 = vunpack.c.l.b16 %v165
  %v262 = vpack.c.b16 %v215, %v214
  %v263 = vpack.c.b16 %v217, %v216
  %v264 = vpack.c.b16 %v219, %v218
  %v265 = vpack.c.b16 %v221, %v220
  %v266 = vpack.c.b16 %v223, %v222
  %v267 = vpack.c.b16 %v225, %v224
  %v268 = vpack.c.b16 %v227, %v226
  %v269 = vpack.c.b16 %v229, %v228
  %v270 = vpack.c.b16 %v231, %v230
  %v271 = vpack.c.b16 %v233, %v232
  %v272 = vpack.c.b16 %v235, %v234
  %v273 = vpack.c.b16 %v237, %v236
  %v274 = vpack.c.b16 %v239, %v238
  %v275 = vpack.c.b16 %v241, %v240
  %v276 = vpack.c.b16 %v243, %v242
  %v277 = vpack.c.b16 %v245, %v244
  %v278 = vpack.c.b16 %v247, %v246
  %v279 = vpack.c.b16 %v249, %v248
  %v280 = vpack.c.b16 %v251, %v250
  %v281 = vpack.c.b16 %v253, %v252
  %v282 = vpack.c.b16 %v255, %v254
  %v283 = vpack.c.b16 %v257, %v256
  %v284 = vpack.c.b16 %v259, %v258
  %v285 = vpack.c.b16 %v261, %v260
  %310 = vmatpush.bf16.msra.mxu0 %v269
  %311 = vmatpush.bf16.msra.mxu0 %v268
  %312 = vmatpush.bf16.msra.mxu0 %v267
  %313 = vmatpush.bf16.msra.mxu0 %v266
  %314 = vmatpush.bf16.msra.mxu0 %v265
  %315 = vmatpush.bf16.msra.mxu0 %v264
  %316 = vmatpush.bf16.msra.mxu0 %v263
  %317 = vmatpush.bf16.msra.mxu0 %v262
  %318 = vmatmul.bf16.gmra.mxu0 %v112
  %v319 = vpop.f32.mrf.mxu0
  %v320 = vadd.f32 0.0, %v319
  %v321 = vpop.f32.mrf.mxu0
  %v322 = vadd.f32 0.0, %v321
  %323 = vmatmul.bf16.gmra.mxu0 %v115
  %v324 = vpop.f32.mrf.mxu0
  %v325 = vadd.f32 0.0, %v324
  %v326 = vpop.f32.mrf.mxu0
  %v327 = vadd.f32 0.0, %v326
  %328 = vdwg.mxu0
  %329 = vmatpush.bf16.msra.mxu0 %v277
  %330 = vmatpush.bf16.msra.mxu0 %v276
  %331 = vmatpush.bf16.msra.mxu0 %v275
  %332 = vmatpush.bf16.msra.mxu0 %v274
  %333 = vmatpush.bf16.msra.mxu0 %v273
  %334 = vmatpush.bf16.msra.mxu0 %v272
  %335 = vmatpush.bf16.msra.mxu0 %v271
  %336 = vmatpush.bf16.msra.mxu0 %v270
  %337 = vmatmul.bf16.gmra.mxu0 %v113
  %v338 = vpop.f32.mrf.mxu0
  %v339 = vadd.f32 %v320, %v338
  %v340 = vpop.f32.mrf.mxu0
  %v341 = vadd.f32 %v322, %v340
  %342 = vmatmul.bf16.gmra.mxu0 %v116
  %v343 = vpop.f32.mrf.mxu0
  %v344 = vadd.f32 %v325, %v343
  %v345 = vpop.f32.mrf.mxu0
  %v346 = vadd.f32 %v327, %v345
  %347 = vdwg.mxu0
  %348 = vmatpush.bf16.msra.mxu0 %v285
  %349 = vmatpush.bf16.msra.mxu0 %v284
  %350 = vmatpush.bf16.msra.mxu0 %v283
  %351 = vmatpush.bf16.msra.mxu0 %v282
  %352 = vmatpush.bf16.msra.mxu0 %v281
  %353 = vmatpush.bf16.msra.mxu0 %v280
  %354 = vmatpush.bf16.msra.mxu0 %v279
  %355 = vmatpush.bf16.msra.mxu0 %v278
  %356 = vmatmul.bf16.gmra.mxu0 %v114
  %v357 = vpop.f32.mrf.mxu0
  %v358 = vadd.f32 %v339, %v357
  %v359 = vpop.f32.mrf.mxu0
  %v360 = vadd.f32 %v341, %v359
  %361 = vmatmul.bf16.gmra.mxu0 %v117
  %v362 = vpop.f32.mrf.mxu0
  %v363 = vadd.f32 %v344, %v362
  %v364 = vpop.f32.mrf.mxu0
  %v365 = vadd.f32 %v346, %v364
  %366 = vdwg.mxu0
  %v367 = vadd.f32 %v358, %v360
  %v368 = vadd.f32 %v367, %v363
  %v369 = vadd.f32 %v368, %v365
  %v370 = vrot.slane %v369, 4
  %v371 = vadd.f32 %v369, %v370
  %v372 = vrot.slane %v371, 2
  %v373 = vadd.f32 %v371, %v372
  %v374 = vrot.slane %v373, 1
  %v375 = vadd.f32 %v373, %v374
  %v376 = vmul.f32 %v358, %v358
  %v377 = vmul.f32 %v360, %v360
  %v378 = vmul.f32 %v363, %v363
  %v379 = vmul.f32 %v365, %v365
  %v380 = vadd.f32 %v376, %v377
  %v381 = vadd.f32 %v380, %v378
  %v382 = vadd.f32 %v381, %v379
  %v383 = vrot.slane %v382, 4
  %v384 = vadd.f32 %v382, %v383
  %v385 = vrot.slane %v384, 2
  %v386 = vadd.f32 %v384, %v385
  %v387 = vrot.slane %v386, 1
  %v388 = vadd.f32 %v386, %v387
  %vm389 = vcmask 1040384
  %v390 = vsel %vm389, %v375, %v388
  %391 = vmatpush.msra.mxu0 %v47
  %392 = vmatpush.msra.mxu0 %v46
  %393 = vmatpush.msra.mxu0 %v45
  %394 = vmatpush.msra.mxu0 %v44
  %395 = vmatpush.msra.mxu0 %v43
  %396 = vmatpush.msra.mxu0 %v42
  %397 = vmatpush.msra.mxu0 %v41
  %398 = vmatpush.msra.mxu0 %v40
  %399 = vmatpush.msra.mxu0 %v39
  %400 = vmatpush.msra.mxu0 %v38
  %401 = vmatpush.msra.mxu0 %v37
  %402 = vmatpush.msra.mxu0 %v36
  %403 = vmatpush.msra.mxu0 %v35
  %404 = vmatpush.msra.mxu0 %v34
  %405 = vmatpush.msra.mxu0 %v33
  %406 = vmatpush.msra.mxu0 %v32
  %407 = vmatmul.f32.gmra.mxu0 %v390
  %v408 = vpop.f32.mrf.mxu0
  %v409 = vadd.f32 0.0, %v408
  %410 = vdwg.mxu0
  %v411 = vmul.f32 %v409, %v409
  %v413 = vrot.slane %v411, 7
  %v415 = vsub.f32 %v409, %v413
  %v416 = vadd.f32 %v415, 1e-05
  %v417 = vrsqrt.pop %v416
  %v418 = vmul.f32 %v417, %v416
  %v419 = vmul.f32 %v418, %v417
  %v420 = vmul.f32 0.5, %v419
  %v421 = vsub.f32 1.5, %v420
  %v422 = vmul.f32 %v417, %v421
  %vm423 = vweird.f32 %v416
  %vm424 = vweird.f32 %v417
  %vm425 = vmor %vm423, %vm424
  %v426 = vsel %vm425, %v417, %v422
  %v428 = vrot.slane %v426, 1
  %v430 = vmul.f32 %v31, %v428
  %v431 = vmul.f32 %v409, %v430
  %v433 = vrot.slane %v431, 7
  %v435 = vsub.f32 %v31, %v433
  %v436 = vperm.slane %v430, 0
  %v437 = vmul.f32 %v358, %v436
  %v438 = vmul.f32 %v360, %v436
  %v439 = vmul.f32 %v363, %v436
  %v440 = vmul.f32 %v365, %v436
  %v441 = vperm.slane %v435, 1
  %v442 = vadd.f32 %v437, %v441
  %v443 = vadd.f32 %v438, %v441
  %v444 = vadd.f32 %v439, %v441
  %v445 = vadd.f32 %v440, %v441
  %vm446 = vcmp.ge.f32.partialorder %v442, 0.0
  %vm447 = vcmp.ge.f32.partialorder %v443, 0.0
  %vm448 = vcmp.ge.f32.partialorder %v444, 0.0
  %vm449 = vcmp.ge.f32.partialorder %v445, 0.0
  %v450 = vmul.f32 %v442, 0.01
  %v451 = vmul.f32 %v443, 0.01
  %v452 = vmul.f32 %v444, 0.01
  %v453 = vmul.f32 %v445, 0.01
  %v454 = vsel %vm446, %v442, %v450
  %v455 = vsel %vm447, %v443, %v451
  %v456 = vsel %vm448, %v444, %v452
  %v457 = vsel %vm449, %v445, %v453
  %v458 = vrot.slane %v454, 7
  %v459 = vrot.slane %v455, 7
  %v460 = vrot.slane %v456, 7
  %v461 = vrot.slane %v457, 7
  %v462 = vsel %vm54, %v460, %v461
  %v463 = vsel %vm54, %v459, %v460
  %v464 = vsel %vm54, %v458, %v459
  %v465 = vsel %vm54, %v461, %v458
  %v466 = vmul.f32 %v465, %v62
  %v467 = vmul.f32 %v464, %v67
  %v468 = vmul.f32 %v463, %v72
  %v469 = vmul.f32 %v462, %v77
  %v470 = vrot.slane %v454, 1
  %v471 = vrot.slane %v455, 1
  %v472 = vrot.slane %v456, 1
  %v473 = vrot.slane %v457, 1
  %v474 = vsel %vm87, %v472, %v473
  %v475 = vsel %vm87, %v471, %v472
  %v476 = vsel %vm87, %v470, %v471
  %v477 = vsel %vm87, %v473, %v470
  %v478 = vmul.f32 %v476, %v94
  %v479 = vmul.f32 %v475, %v98
  %v480 = vmul.f32 %v474, %v102
  %v481 = vmul.f32 %v477, %v106
  %v482 = vpack.c.bf16 %v467, %v466
  %v483 = vpack.c.bf16 %v455, %v454
  %v484 = vpack.c.bf16 %v479, %v478
  %v485 = vpack.c.bf16 %v469, %v468
  %v486 = vpack.c.bf16 %v457, %v456
  %v487 = vpack.c.bf16 %v481, %v480
  %v488 = vld [vmem:[%s2] sm:$0xf]
  %v489 = vld [vmem:[%s2 + $0x4] sm:$0xf]
  %v490 = vld [vmem:[%s2 + $0x8] sm:$0xf]
  %v491 = vld [vmem:[%s2 + $0xc] sm:$0xf]
  %v492 = vld [vmem:[%s2 + $0x10] sm:$0xf]
  %v493 = vld [vmem:[%s2 + $0x14] sm:$0xf]
  %v494 = vld [vmem:[%s2 + $0x18] sm:$0xf]
  %v495 = vld [vmem:[%s2 + $0x1c] sm:$0xf]
  %v496 = vld [vmem:[%s2 + $0x20] sm:$0xf]
  %v497 = vld [vmem:[%s2 + $0x24] sm:$0xf]
  %v498 = vld [vmem:[%s2 + $0x28] sm:$0xf]
  %v499 = vld [vmem:[%s2 + $0x2c] sm:$0xf]
  %v500 = vld [vmem:[%s2 + $0x30] sm:$0xf]
  %v501 = vld [vmem:[%s2 + $0x34] sm:$0xf]
  %v502 = vld [vmem:[%s2 + $0x38] sm:$0xf]
  %v503 = vld [vmem:[%s2 + $0x3c] sm:$0xf]
  %v504 = vld [vmem:[%s2 + $0x40] sm:$0xf]
  %v505 = vld [vmem:[%s2 + $0x44] sm:$0xf]
  %v506 = vld [vmem:[%s2 + $0x48] sm:$0xf]
  %v507 = vld [vmem:[%s2 + $0x4c] sm:$0xf]
  %v508 = vld [vmem:[%s2 + $0x50] sm:$0xf]
  %v509 = vld [vmem:[%s2 + $0x54] sm:$0xf]
  %v510 = vld [vmem:[%s2 + $0x58] sm:$0xf]
  %v511 = vld [vmem:[%s2 + $0x5c] sm:$0xf]
  %v512 = vld [vmem:[%s2 + $0x60] sm:$0xf]
  %v513 = vld [vmem:[%s2 + $0x64] sm:$0xf]
  %v514 = vld [vmem:[%s2 + $0x68] sm:$0xf]
  %v515 = vld [vmem:[%s2 + $0x6c] sm:$0xf]
  %v516 = vld [vmem:[%s2 + $0x70] sm:$0xf]
  %v517 = vld [vmem:[%s2 + $0x74] sm:$0xf]
  %v518 = vld [vmem:[%s2 + $0x78] sm:$0xf]
  %v519 = vld [vmem:[%s2 + $0x7c] sm:$0xf]
  %v520 = vld [vmem:[%s2 + $0x80] sm:$0xf]
  %v521 = vld [vmem:[%s2 + $0x84] sm:$0xf]
  %v522 = vld [vmem:[%s2 + $0x88] sm:$0xf]
  %v523 = vld [vmem:[%s2 + $0x8c] sm:$0xf]
  %v524 = vld [vmem:[%s2 + $0x90] sm:$0xf]
  %v525 = vld [vmem:[%s2 + $0x94] sm:$0xf]
  %v526 = vld [vmem:[%s2 + $0x98] sm:$0xf]
  %v527 = vld [vmem:[%s2 + $0x9c] sm:$0xf]
  %v528 = vld [vmem:[%s2 + $0xa0] sm:$0xf]
  %v529 = vld [vmem:[%s2 + $0xa4] sm:$0xf]
  %v530 = vld [vmem:[%s2 + $0xa8] sm:$0xf]
  %v531 = vld [vmem:[%s2 + $0xac] sm:$0xf]
  %v532 = vld [vmem:[%s2 + $0xb0] sm:$0xf]
  %v533 = vld [vmem:[%s2 + $0xb4] sm:$0xf]
  %v534 = vld [vmem:[%s2 + $0xb8] sm:$0xf]
  %v535 = vld [vmem:[%s2 + $0xbc] sm:$0xf]
  %v584 = vunpack.c.l.b16 %v488
  %v585 = vunpack.c.l.b16 %v489
  %v586 = vunpack.c.l.b16 %v490
  %v587 = vunpack.c.l.b16 %v491
  %v588 = vunpack.c.l.b16 %v492
  %v589 = vunpack.c.l.b16 %v493
  %v590 = vunpack.c.l.b16 %v494
  %v591 = vunpack.c.l.b16 %v495
  %v592 = vunpack.c.l.b16 %v496
  %v593 = vunpack.c.l.b16 %v497
  %v594 = vunpack.c.l.b16 %v498
  %v595 = vunpack.c.l.b16 %v499
  %v596 = vunpack.c.l.b16 %v500
  %v597 = vunpack.c.l.b16 %v501
  %v598 = vunpack.c.l.b16 %v502
  %v599 = vunpack.c.l.b16 %v503
  %v600 = vunpack.c.l.b16 %v504
  %v601 = vunpack.c.l.b16 %v505
  %v602 = vunpack.c.l.b16 %v506
  %v603 = vunpack.c.l.b16 %v507
  %v604 = vunpack.c.l.b16 %v508
  %v605 = vunpack.c.l.b16 %v509
  %v606 = vunpack.c.l.b16 %v510
  %v607 = vunpack.c.l.b16 %v511
  %v608 = vunpack.c.l.b16 %v512
  %v609 = vunpack.c.l.b16 %v513
  %v610 = vunpack.c.l.b16 %v514
  %v611 = vunpack.c.l.b16 %v515
  %v612 = vunpack.c.l.b16 %v516
  %v613 = vunpack.c.l.b16 %v517
  %v614 = vunpack.c.l.b16 %v518
  %v615 = vunpack.c.l.b16 %v519
  %v616 = vunpack.c.l.b16 %v520
  %v617 = vunpack.c.l.b16 %v521
  %v618 = vunpack.c.l.b16 %v522
  %v619 = vunpack.c.l.b16 %v523
  %v620 = vunpack.c.l.b16 %v524
  %v621 = vunpack.c.l.b16 %v525
  %v622 = vunpack.c.l.b16 %v526
  %v623 = vunpack.c.l.b16 %v527
  %v624 = vunpack.c.l.b16 %v528
  %v625 = vunpack.c.l.b16 %v529
  %v626 = vunpack.c.l.b16 %v530
  %v627 = vunpack.c.l.b16 %v531
  %v628 = vunpack.c.l.b16 %v532
  %v629 = vunpack.c.l.b16 %v533
  %v630 = vunpack.c.l.b16 %v534
  %v631 = vunpack.c.l.b16 %v535
  %v632 = vpack.c.b16 %v585, %v584
  %v633 = vpack.c.b16 %v587, %v586
  %v634 = vpack.c.b16 %v589, %v588
  %v635 = vpack.c.b16 %v591, %v590
  %v636 = vpack.c.b16 %v593, %v592
  %v637 = vpack.c.b16 %v595, %v594
  %v638 = vpack.c.b16 %v597, %v596
  %v639 = vpack.c.b16 %v599, %v598
  %v640 = vpack.c.b16 %v601, %v600
  %v641 = vpack.c.b16 %v603, %v602
  %v642 = vpack.c.b16 %v605, %v604
  %v643 = vpack.c.b16 %v607, %v606
  %v644 = vpack.c.b16 %v609, %v608
  %v645 = vpack.c.b16 %v611, %v610
  %v646 = vpack.c.b16 %v613, %v612
  %v647 = vpack.c.b16 %v615, %v614
  %v648 = vpack.c.b16 %v617, %v616
  %v649 = vpack.c.b16 %v619, %v618
  %v650 = vpack.c.b16 %v621, %v620
  %v651 = vpack.c.b16 %v623, %v622
  %v652 = vpack.c.b16 %v625, %v624
  %v653 = vpack.c.b16 %v627, %v626
  %v654 = vpack.c.b16 %v629, %v628
  %v655 = vpack.c.b16 %v631, %v630
  %680 = vmatpush.bf16.msra.mxu0 %v639
  %681 = vmatpush.bf16.msra.mxu0 %v638
  %682 = vmatpush.bf16.msra.mxu0 %v637
  %683 = vmatpush.bf16.msra.mxu0 %v636
  %684 = vmatpush.bf16.msra.mxu0 %v635
  %685 = vmatpush.bf16.msra.mxu0 %v634
  %686 = vmatpush.bf16.msra.mxu0 %v633
  %687 = vmatpush.bf16.msra.mxu0 %v632
  %688 = vmatmul.bf16.gmra.mxu0 %v482
  %v689 = vpop.f32.mrf.mxu0
  %v690 = vadd.f32 0.0, %v689
  %v691 = vpop.f32.mrf.mxu0
  %v692 = vadd.f32 0.0, %v691
  %693 = vmatmul.bf16.gmra.mxu0 %v485
  %v694 = vpop.f32.mrf.mxu0
  %v695 = vadd.f32 0.0, %v694
  %v696 = vpop.f32.mrf.mxu0
  %v697 = vadd.f32 0.0, %v696
  %698 = vdwg.mxu0
  %699 = vmatpush.bf16.msra.mxu0 %v647
  %700 = vmatpush.bf16.msra.mxu0 %v646
  %701 = vmatpush.bf16.msra.mxu0 %v645
  %702 = vmatpush.bf16.msra.mxu0 %v644
  %703 = vmatpush.bf16.msra.mxu0 %v643
  %704 = vmatpush.bf16.msra.mxu0 %v642
  %705 = vmatpush.bf16.msra.mxu0 %v641
  %706 = vmatpush.bf16.msra.mxu0 %v640
  %707 = vmatmul.bf16.gmra.mxu0 %v483
  %v708 = vpop.f32.mrf.mxu0
  %v709 = vadd.f32 %v690, %v708
  %v710 = vpop.f32.mrf.mxu0
  %v711 = vadd.f32 %v692, %v710
  %712 = vmatmul.bf16.gmra.mxu0 %v486
  %v713 = vpop.f32.mrf.mxu0
  %v714 = vadd.f32 %v695, %v713
  %v715 = vpop.f32.mrf.mxu0
  %v716 = vadd.f32 %v697, %v715
  %717 = vdwg.mxu0
  %718 = vmatpush.bf16.msra.mxu0 %v655
  %719 = vmatpush.bf16.msra.mxu0 %v654
  %720 = vmatpush.bf16.msra.mxu0 %v653
  %721 = vmatpush.bf16.msra.mxu0 %v652
  %722 = vmatpush.bf16.msra.mxu0 %v651
  %723 = vmatpush.bf16.msra.mxu0 %v650
  %724 = vmatpush.bf16.msra.mxu0 %v649
  %725 = vmatpush.bf16.msra.mxu0 %v648
  %726 = vmatmul.bf16.gmra.mxu0 %v484
  %v727 = vpop.f32.mrf.mxu0
  %v728 = vadd.f32 %v709, %v727
  %v729 = vpop.f32.mrf.mxu0
  %v730 = vadd.f32 %v711, %v729
  %731 = vmatmul.bf16.gmra.mxu0 %v487
  %v732 = vpop.f32.mrf.mxu0
  %v733 = vadd.f32 %v714, %v732
  %v734 = vpop.f32.mrf.mxu0
  %v735 = vadd.f32 %v716, %v734
  %736 = vdwg.mxu0
  %v737 = vadd.f32 %v728, %v730
  %v738 = vadd.f32 %v737, %v733
  %v739 = vadd.f32 %v738, %v735
  %v740 = vrot.slane %v739, 4
  %v741 = vadd.f32 %v739, %v740
  %v742 = vrot.slane %v741, 2
  %v743 = vadd.f32 %v741, %v742
  %v744 = vrot.slane %v743, 1
  %v745 = vadd.f32 %v743, %v744
  %v746 = vmul.f32 %v728, %v728
  %v747 = vmul.f32 %v730, %v730
  %v748 = vmul.f32 %v733, %v733
  %v749 = vmul.f32 %v735, %v735
  %v750 = vadd.f32 %v746, %v747
  %v751 = vadd.f32 %v750, %v748
  %v752 = vadd.f32 %v751, %v749
  %v753 = vrot.slane %v752, 4
  %v754 = vadd.f32 %v752, %v753
  %v755 = vrot.slane %v754, 2
  %v756 = vadd.f32 %v754, %v755
  %v757 = vrot.slane %v756, 1
  %v758 = vadd.f32 %v756, %v757
  %v759 = vsel %vm389, %v745, %v758
  %760 = vmatpush.msra.mxu0 %v47
  %761 = vmatpush.msra.mxu0 %v46
  %762 = vmatpush.msra.mxu0 %v45
  %763 = vmatpush.msra.mxu0 %v44
  %764 = vmatpush.msra.mxu0 %v43
  %765 = vmatpush.msra.mxu0 %v42
  %766 = vmatpush.msra.mxu0 %v41
  %767 = vmatpush.msra.mxu0 %v40
  %768 = vmatpush.msra.mxu0 %v39
  %769 = vmatpush.msra.mxu0 %v38
  %770 = vmatpush.msra.mxu0 %v37
  %771 = vmatpush.msra.mxu0 %v36
  %772 = vmatpush.msra.mxu0 %v35
  %773 = vmatpush.msra.mxu0 %v34
  %774 = vmatpush.msra.mxu0 %v33
  %775 = vmatpush.msra.mxu0 %v32
  %776 = vmatmul.f32.gmra.mxu0 %v759
  %v777 = vpop.f32.mrf.mxu0
  %v778 = vadd.f32 0.0, %v777
  %779 = vdwg.mxu0
  %v780 = vmul.f32 %v778, %v778
  %v782 = vrot.slane %v780, 7
  %v784 = vsub.f32 %v778, %v782
  %v785 = vadd.f32 %v784, 1e-05
  %v786 = vrsqrt.pop %v785
  %v787 = vmul.f32 %v786, %v785
  %v788 = vmul.f32 %v787, %v786
  %v789 = vmul.f32 0.5, %v788
  %v790 = vsub.f32 1.5, %v789
  %v791 = vmul.f32 %v786, %v790
  %vm792 = vweird.f32 %v785
  %vm793 = vweird.f32 %v786
  %vm794 = vmor %vm792, %vm793
  %v795 = vsel %vm794, %v786, %v791
  %v797 = vrot.slane %v795, 7
  %v799 = vmul.f32 %v31, %v797
  %v801 = vrot.slane %v799, 2
  %v803 = vmul.f32 %v778, %v801
  %v805 = vrot.slane %v803, 5
  %v807 = vsub.f32 %v31, %v805
  %v808 = vperm.slane %v799, 2
  %v809 = vmul.f32 %v728, %v808
  %v810 = vmul.f32 %v730, %v808
  %v811 = vmul.f32 %v733, %v808
  %v812 = vmul.f32 %v735, %v808
  %v813 = vperm.slane %v807, 3
  %v814 = vadd.f32 %v809, %v813
  %v815 = vadd.f32 %v810, %v813
  %v816 = vadd.f32 %v811, %v813
  %v817 = vadd.f32 %v812, %v813
  %vm818 = vcmp.ge.f32.partialorder %v814, 0.0
  %vm819 = vcmp.ge.f32.partialorder %v815, 0.0
  %vm820 = vcmp.ge.f32.partialorder %v816, 0.0
  %vm821 = vcmp.ge.f32.partialorder %v817, 0.0
  %v822 = vmul.f32 %v814, 0.01
  %v823 = vmul.f32 %v815, 0.01
  %v824 = vmul.f32 %v816, 0.01
  %v825 = vmul.f32 %v817, 0.01
  %v826 = vsel %vm818, %v814, %v822
  %v827 = vsel %vm819, %v815, %v823
  %v828 = vsel %vm820, %v816, %v824
  %v829 = vsel %vm821, %v817, %v825
  %830 = vst [vmem:[%s6] sm:$0xff] %v826
  %831 = vst [vmem:[%s6 + $0x8] sm:$0xff] %v827
  %832 = vst [vmem:[%s6 + $0x10] sm:$0xff] %v828
  %833 = vst [vmem:[%s6 + $0x18] sm:$0xff] %v829
  // Predicated region
  $region26: #{refinement_forward.1} parent=0 // pred_check
    _
  $region27: #{refinement_forward.1} parent=0 // pred_check_branch
    %835 = sbr.rel (0) target = $region29
  $region28: #{refinement_forward.1} parent=0 // pred_region
    _
  $region29: #{refinement_forward.1} parent=0 // pred_fallthru
    _
  // Predicated region
  $region30: #{refinement_forward.1} parent=0 // pred_check
    _
  $region31: #{refinement_forward.1} parent=0 // pred_check_branch
    %837 = sbr.rel (0) target = $region33
  $region32: #{refinement_forward.1} parent=0 // pred_region
    _
  $region33: #{refinement_forward.1} parent=0 // pred_fallthru
    _

</llo_original>
